<compile_context>
chip_gen: v7x
topology: tpu7x:2x2x1
jax: 0.10.0
libtpu: 0.0.40
codegen_flags: <defaults>
</compile_context>

<pallas_src>
import typing as tp

import numpy as np
import jax
import jax.numpy as jnp
from jax.experimental import pallas as pl
from jax.experimental.pallas import tpu as pltpu


# ------------------------------------------------------------------ #
# band-index computation (numpy mirror of the torch helpers)          #
# ------------------------------------------------------------------ #
def get_fftfreq(sr: int = 44100, n_fft: int = 2048) -> np.ndarray:
    out = sr * np.fft.fftfreq(n_fft)[: n_fft // 2 + 1]
    out[-1] = sr // 2
    return out


def get_subband_indices(
    freqs: np.ndarray, splits: tp.List[tp.Tuple[int, int]]
) -> tp.List[tp.Tuple[int, int]]:
    indices = []
    start_freq, start_index = 0, 0
    for end_freq, step in splits:
        bands = np.arange(start_freq + step, end_freq + step, step)
        start_freq = end_freq
        for band in bands:
            end_index = int(np.sum(freqs < band))
            indices.append((start_index, end_index))
            start_index = end_index
    indices.append((start_index, int(freqs.shape[0])))
    return indices


def freq2bands(
    bandsplits: tp.List[tp.Tuple[int, int]], sr: int = 44100, n_fft: int = 2048
) -> tp.List[tp.Tuple[int, int]]:
    return get_subband_indices(get_fftfreq(sr=sr, n_fft=n_fft), bandsplits)


# ------------------------------------------------------------------ #
# Pallas kernel: whole band-merge in one launch, grid over BT tiles   #
# ------------------------------------------------------------------ #
def _make_bandmerge_kernel(group_meta, n_freq):
    """group_meta: tuple per width-group of ((band_idx, start_col, width), ...)."""

    def kernel(x_ref, *refs):
        # x_ref : (N, bt, H)     bf16 -- all bands of this BT tile
        # refs  : w_g0, b_g0, w_g1, b_g1, ..., o_ref
        #   w_g : (Ng, H, 2*w)   bf16 (index_map constant in t -> VMEM-resident)
        #   b_g : (Ng, 1, 2*w)   f32
        # o_ref : (bt, 2*F)      out_dtype, lane-dense, torch-cat column layout
        o_ref = refs[-1]
        for g, meta in enumerate(group_meta):
            w_ref = refs[2 * g]
            b_ref = refs[2 * g + 1]
            for i, (k, start, wdt) in enumerate(meta):
                res = jnp.dot(
                    x_ref[k], w_ref[i], preferred_element_type=jnp.float32
                )
                res = (res + b_ref[i]).astype(o_ref.dtype)  # (bt, 2*wdt)
                # torch does fc_k(x).view(B,T,2,w) then cat(dim=-1): band k's
                # column j*w + c lands at flattened-(2,F) column j*F + start + c.
                o_ref[:, start:start + wdt] = res[:, :wdt]
                o_ref[:, n_freq + start:n_freq + start + wdt] = res[:, wdt:]

    return kernel


def bandmerge_pallas(x_bands, groups, n_freq, *, bt_tile=2048,
                     out_dtype=jnp.float32,
                     vmem_budget_bytes=40 * 1024 * 1024):
    """x_bands: (N, BT, H) compute dtype (bf16).  Returns (BT, 2*F) out_dtype."""
    N, BT, H = x_bands.shape
    two_f = 2 * n_freq
    in_bytes = jnp.dtype(x_bands.dtype).itemsize
    out_bytes = jnp.dtype(out_dtype).itemsize
    w_bytes = sum(int(g["w"].size) * jnp.dtype(g["w"].dtype).itemsize
                  + int(g["b"].size) * jnp.dtype(g["b"].dtype).itemsize
                  for g in groups)

    def footprint(b):
        # double-buffered x + output blocks, (double-buffered) resident weights
        return (2 * N * b * H * in_bytes
                + 2 * b * two_f * out_bytes
                + 2 * w_bytes)

    # Big tiles amortize the ~0.35 us per-step overhead; shrink only if the
    # double-buffered working set would not fit a v7x-safe VMEM budget.
    bt = min(bt_tile, BT)
    if bt < BT:
        bt = min(BT, max(256, (bt // 256) * 256))
        while bt > 256 and footprint(bt) > vmem_budget_bytes:
            bt //= 2
    vmem_limit = max(32 * 1024 * 1024, footprint(bt) + 4 * 1024 * 1024)

    group_meta = tuple(tuple(g["meta"]) for g in groups)
    kernel = _make_bandmerge_kernel(group_meta, n_freq)

    in_specs = [pl.BlockSpec((N, bt, H), lambda t: (0, t, 0))]
    operands = [x_bands]
    for g in groups:
        ng, _, dg = g["w"].shape
        in_specs.append(pl.BlockSpec((ng, H, dg), lambda t: (0, 0, 0)))
        in_specs.append(pl.BlockSpec((ng, 1, dg), lambda t: (0, 0, 0)))
        operands.append(g["w"])
        operands.append(g["b"])

    return pl.pallas_call(
        kernel,
        out_shape=jax.ShapeDtypeStruct((BT, two_f), out_dtype),
        grid=(pl.cdiv(BT, bt),),
        in_specs=in_specs,
        out_specs=pl.BlockSpec((bt, two_f), lambda t: (t, 0)),
        compiler_params=pltpu.CompilerParams(
            dimension_semantics=("parallel",),
            vmem_limit_bytes=int(vmem_limit),
        ),
    )(*operands)


# ------------------------------------------------------------------ #
# Module wrapper                                                      #
# ------------------------------------------------------------------ #
class BandMergeModulePallas:
    def __init__(self, bandsplits, fc_dim: int = 128, sr: int = 16000,
                 n_fft: int = 1024, key=None, compute_dtype=jnp.bfloat16,
                 out_dtype=jnp.float32, bt_tile: int = 2048):
        self.band_indices = freq2bands(bandsplits, sr, n_fft)
        self.fc_dim = fc_dim
        self.compute_dtype = compute_dtype
        self.out_dtype = out_dtype
        self.bt_tile = bt_tile
        self.widths = [e - s for s, e in self.band_indices]
        self.starts = [s for s, _ in self.band_indices]
        self.n_bands = len(self.band_indices)
        self.freq_bins = self.band_indices[-1][1]

        key = jax.random.PRNGKey(0) if key is None else key
        bound = 1.0 / np.sqrt(fc_dim)  # nn.Linear default init range

        # per-band parameters (f32 masters, used by the references)
        self.weights, self.biases = [], []
        for k, wdt in enumerate(self.widths):
            kw, kb = jax.random.split(jax.random.fold_in(key, k))
            self.weights.append(
                jax.random.uniform(kw, (fc_dim, 2 * wdt), jnp.float32, -bound, bound))
            self.biases.append(
                jax.random.uniform(kb, (2 * wdt,), jnp.float32, -bound, bound))

        # Bands sharing an output width share one stacked weight operand;
        # the whole merge still runs in a SINGLE pallas_call.
        by_width: tp.Dict[int, tp.List[int]] = {}
        for k, wdt in enumerate(self.widths):
            by_width.setdefault(wdt, []).append(k)
        self.groups = []
        for wdt, ids in by_width.items():
            self.groups.append(dict(
                width=wdt,
                meta=tuple((k, self.starts[k], wdt) for k in ids),
                w=jnp.stack([self.weights[k] for k in ids]).astype(compute_dtype),
                b=jnp.stack([self.biases[k][None, :] for k in ids]),  # (Ng,1,2w) f32
            ))

    def __call__(self, bands: jax.Array) -> jax.Array:
        # bands: (B, H, T, N) -- same layout the torch module receives
        B, H, T, N = bands.shape
        assert H == self.fc_dim and N == self.n_bands
        # band-major (N, B*T, H); the bf16 cast fuses into the same XLA pass.
        # TODO(synk): have the upstream BandSplit/RNN producer emit (N, B*T, H)
        # bf16 directly so this transpose+cast HBM pass disappears entirely.
        x = jnp.transpose(bands, (3, 0, 2, 1)).reshape(N, B * T, H)
        x = x.astype(self.compute_dtype)

        y = bandmerge_pallas(x, self.groups, self.freq_bins,
                             bt_tile=self.bt_tile,
                             out_dtype=self.out_dtype)       # (B*T, 2F)
        out = y.reshape(B, T, 2, self.freq_bins)             # free axis split
        # TODO(synk): drop this transpose if the consumer accepts (B, T, 2, F);
        # (B, F, T, 2) is lane-sparse (last dim 2) for downstream TPU kernels.
        return jnp.transpose(out, (0, 3, 1, 2)).astype(jnp.float32)  # (B, F, T, 2)

    # pure-JAX reference mirroring the torch forward in full f32
    def reference_f32(self, bands: jax.Array) -> jax.Array:
        x = jnp.transpose(bands, (0, 2, 1, 3))                      # (B, T, H, N)
        B, T, H, N = x.shape
        outs = []
        for k, (s, e) in enumerate(self.band_indices):
            w = e - s
            y = jnp.einsum("bth,hd->btd", x[..., k], self.weights[k],
                           precision=jax.lax.Precision.HIGHEST) + self.biases[k]
            outs.append(y.reshape(B, T, 2, w))
        out = jnp.concatenate(outs, axis=-1)
        return jnp.transpose(out, (0, 3, 1, 2))

    # same math with the kernel's precision choice (bf16 in, f32 accumulate)
    def reference_compute_dtype(self, bands: jax.Array) -> jax.Array:
        x = jnp.transpose(bands, (0, 2, 1, 3)).astype(self.compute_dtype)
        B, T, H, N = x.shape
        outs = []
        for k, (s, e) in enumerate(self.band_indices):
            w = e - s
            y = jnp.einsum("bth,hd->btd", x[..., k],
                           self.weights[k].astype(self.compute_dtype),
                           preferred_element_type=jnp.float32) + self.biases[k]
            outs.append(y.reshape(B, T, 2, w))
        out = jnp.concatenate(outs, axis=-1)
        return jnp.transpose(out, (0, 3, 1, 2))


# ------------------------------------------------------------------ #
if __name__ == "__main__":
    # small, deterministic test setup
    bandsplits = [(2000, 500), (8000, 2000)]  # 8 bands, widths [32x4, 128x3, 1]
    sr, n_fft, fc_dim = 16000, 1024, 32
    B, T = 2, 8

    module = BandMergeModulePallas(bandsplits, fc_dim=fc_dim, sr=sr, n_fft=n_fft,
                                   key=jax.random.PRNGKey(0))
    N = module.n_bands

    x = jax.random.normal(jax.random.PRNGKey(0), (B, fc_dim, T, N), jnp.float32)

    out = jax.block_until_ready(module(x))
    assert out.shape == (B, module.freq_bins, T, 2), out.shape

    # tight check against a reference using the same bf16/f32-accumulate precision
    ref_c = module.reference_compute_dtype(x)
    err_c = float(jnp.max(jnp.abs(out - ref_c)))
    assert jnp.allclose(out, ref_c, rtol=1e-3, atol=1e-3), err_c

    # loose check against the full-f32 (torch-semantics) reference
    ref_f = module.reference_f32(x)
    err_f = float(jnp.max(jnp.abs(out - ref_f)))
    assert jnp.allclose(out, ref_f, rtol=5e-2, atol=5e-2), err_f

    print("KERNEL_OK")
</pallas_src>

<mosaic_0001>
module attributes {stable_mosaic.version = 11 : i64} {
  func.func @kernel(%arg0: i32, %arg1: memref<8x16x32xbf16, #tpu.memory_space<vmem>>, %arg2: memref<4x32x64xbf16, #tpu.memory_space<vmem>>, %arg3: memref<4x1x64xf32, #tpu.memory_space<vmem>>, %arg4: memref<3x32x256xbf16, #tpu.memory_space<vmem>>, %arg5: memref<3x1x256xf32, #tpu.memory_space<vmem>>, %arg6: memref<1x32x2xbf16, #tpu.memory_space<vmem>>, %arg7: memref<1x1x2xf32, #tpu.memory_space<vmem>>, %arg8: memref<16x1026xf32, #tpu.memory_space<vmem>>) attributes {dimension_semantics = [#tpu.dimension_semantics<parallel>], iteration_bounds = array<i64: 1>, scalar_prefetch = 0 : i64, scratch_operands = 0 : i64, tpu.core_type = #tpu.core_type<tc>, window_params = [{transform_indices = @transform_0, window_bounds = array<i64: 8, 16, 32>}, {pipeline_mode = #tpu.pipeline_mode<synchronous>, transform_indices = @transform_1, window_bounds = array<i64: 4, 32, 64>}, {pipeline_mode = #tpu.pipeline_mode<synchronous>, transform_indices = @transform_2, window_bounds = array<i64: 4, 1, 64>}, {pipeline_mode = #tpu.pipeline_mode<synchronous>, transform_indices = @transform_3, window_bounds = array<i64: 3, 32, 256>}, {pipeline_mode = #tpu.pipeline_mode<synchronous>, transform_indices = @transform_4, window_bounds = array<i64: 3, 1, 256>}, {pipeline_mode = #tpu.pipeline_mode<synchronous>, transform_indices = @transform_5, window_bounds = array<i64: 1, 32, 2>}, {pipeline_mode = #tpu.pipeline_mode<synchronous>, transform_indices = @transform_6, window_bounds = array<i64: 1, 1, 2>}, {transform_indices = @transform_7, window_bounds = array<i64: 16, 1026>}]} {
    %c0 = arith.constant 0 : index
    %c0_0 = arith.constant 0 : index
    %c0_1 = arith.constant 0 : index
    %0 = vector.load %arg1[%c0, %c0_0, %c0_1] : memref<8x16x32xbf16, #tpu.memory_space<vmem>>, vector<1x16x32xbf16>
    %1 = vector.shape_cast %0 : vector<1x16x32xbf16> to vector<16x32xbf16>
    %c0_2 = arith.constant 0 : index
    %c0_3 = arith.constant 0 : index
    %c0_4 = arith.constant 0 : index
    %2 = vector.load %arg2[%c0_2, %c0_3, %c0_4] : memref<4x32x64xbf16, #tpu.memory_space<vmem>>, vector<1x32x64xbf16>
    %3 = vector.shape_cast %2 : vector<1x32x64xbf16> to vector<32x64xbf16>
    %cst = arith.constant dense<0.000000e+00> : vector<16x64xf32>
    %4 = tpu.matmul %1, %3, %cst {dimension_numbers = #tpu.dot_dimension_numbers<[1], [0], [0], [1], [0, 0, 1, 1], [], []>} : vector<16x32xbf16>, vector<32x64xbf16>, vector<16x64xf32> -> vector<16x64xf32>
    %c0_5 = arith.constant 0 : index
    %c0_6 = arith.constant 0 : index
    %c0_7 = arith.constant 0 : index
    %5 = vector.load %arg3[%c0_5, %c0_6, %c0_7] : memref<4x1x64xf32, #tpu.memory_space<vmem>>, vector<1x1x64xf32>
    %6 = vector.shape_cast %5 : vector<1x1x64xf32> to vector<1x64xf32>
    %7 = vector.broadcast %6 : vector<1x64xf32> to vector<16x64xf32>
    %8 = arith.addf %4, %7 : vector<16x64xf32>
    %9 = vector.extract_strided_slice %8 {offsets = [0, 0], sizes = [16, 32], strides = [1, 1]} : vector<16x64xf32> to vector<16x32xf32>
    %c0_8 = arith.constant 0 : index
    %c0_9 = arith.constant 0 : index
    %10 = vector.load %arg8[%c0_8, %c0_9] : memref<16x1026xf32, #tpu.memory_space<vmem>>, vector<16x32xf32>
    tpu.vector_store %arg8[%c0_8, %c0_9], %9 {strides = array<i32>} : memref<16x1026xf32, #tpu.memory_space<vmem>>, vector<16x32xf32>,
    %11 = vector.extract_strided_slice %8 {offsets = [0, 32], sizes = [16, 32], strides = [1, 1]} : vector<16x64xf32> to vector<16x32xf32>
    %c0_10 = arith.constant 0 : index
    %c513 = arith.constant 513 : index
    %12 = vector.load %arg8[%c0_10, %c513] : memref<16x1026xf32, #tpu.memory_space<vmem>>, vector<16x32xf32>
    tpu.vector_store %arg8[%c0_10, %c513], %11 {strides = array<i32>} : memref<16x1026xf32, #tpu.memory_space<vmem>>, vector<16x32xf32>,
    %c1 = arith.constant 1 : index
    %c0_11 = arith.constant 0 : index
    %c0_12 = arith.constant 0 : index
    %13 = vector.load %arg1[%c1, %c0_11, %c0_12] : memref<8x16x32xbf16, #tpu.memory_space<vmem>>, vector<1x16x32xbf16>
    %14 = vector.shape_cast %13 : vector<1x16x32xbf16> to vector<16x32xbf16>
    %c1_13 = arith.constant 1 : index
    %c0_14 = arith.constant 0 : index
    %c0_15 = arith.constant 0 : index
    %15 = vector.load %arg2[%c1_13, %c0_14, %c0_15] : memref<4x32x64xbf16, #tpu.memory_space<vmem>>, vector<1x32x64xbf16>
    %16 = vector.shape_cast %15 : vector<1x32x64xbf16> to vector<32x64xbf16>
    %cst_16 = arith.constant dense<0.000000e+00> : vector<16x64xf32>
    %17 = tpu.matmul %14, %16, %cst_16 {dimension_numbers = #tpu.dot_dimension_numbers<[1], [0], [0], [1], [0, 0, 1, 1], [], []>} : vector<16x32xbf16>, vector<32x64xbf16>, vector<16x64xf32> -> vector<16x64xf32>
    %c1_17 = arith.constant 1 : index
    %c0_18 = arith.constant 0 : index
    %c0_19 = arith.constant 0 : index
    %18 = vector.load %arg3[%c1_17, %c0_18, %c0_19] : memref<4x1x64xf32, #tpu.memory_space<vmem>>, vector<1x1x64xf32>
    %19 = vector.shape_cast %18 : vector<1x1x64xf32> to vector<1x64xf32>
    %20 = vector.broadcast %19 : vector<1x64xf32> to vector<16x64xf32>
    %21 = arith.addf %17, %20 : vector<16x64xf32>
    %22 = vector.extract_strided_slice %21 {offsets = [0, 0], sizes = [16, 32], strides = [1, 1]} : vector<16x64xf32> to vector<16x32xf32>
    %c0_20 = arith.constant 0 : index
    %c32 = arith.constant 32 : index
    %23 = vector.load %arg8[%c0_20, %c32] : memref<16x1026xf32, #tpu.memory_space<vmem>>, vector<16x32xf32>
    tpu.vector_store %arg8[%c0_20, %c32], %22 {strides = array<i32>} : memref<16x1026xf32, #tpu.memory_space<vmem>>, vector<16x32xf32>,
    %24 = vector.extract_strided_slice %21 {offsets = [0, 32], sizes = [16, 32], strides = [1, 1]} : vector<16x64xf32> to vector<16x32xf32>
    %c0_21 = arith.constant 0 : index
    %c545 = arith.constant 545 : index
    %25 = vector.load %arg8[%c0_21, %c545] : memref<16x1026xf32, #tpu.memory_space<vmem>>, vector<16x32xf32>
    tpu.vector_store %arg8[%c0_21, %c545], %24 {strides = array<i32>} : memref<16x1026xf32, #tpu.memory_space<vmem>>, vector<16x32xf32>,
    %c2 = arith.constant 2 : index
    %c0_22 = arith.constant 0 : index
    %c0_23 = arith.constant 0 : index
    %26 = vector.load %arg1[%c2, %c0_22, %c0_23] : memref<8x16x32xbf16, #tpu.memory_space<vmem>>, vector<1x16x32xbf16>
    %27 = vector.shape_cast %26 : vector<1x16x32xbf16> to vector<16x32xbf16>
    %c2_24 = arith.constant 2 : index
    %c0_25 = arith.constant 0 : index
    %c0_26 = arith.constant 0 : index
    %28 = vector.load %arg2[%c2_24, %c0_25, %c0_26] : memref<4x32x64xbf16, #tpu.memory_space<vmem>>, vector<1x32x64xbf16>
    %29 = vector.shape_cast %28 : vector<1x32x64xbf16> to vector<32x64xbf16>
    %cst_27 = arith.constant dense<0.000000e+00> : vector<16x64xf32>
    %30 = tpu.matmul %27, %29, %cst_27 {dimension_numbers = #tpu.dot_dimension_numbers<[1], [0], [0], [1], [0, 0, 1, 1], [], []>} : vector<16x32xbf16>, vector<32x64xbf16>, vector<16x64xf32> -> vector<16x64xf32>
    %c2_28 = arith.constant 2 : index
    %c0_29 = arith.constant 0 : index
    %c0_30 = arith.constant 0 : index
    %31 = vector.load %arg3[%c2_28, %c0_29, %c0_30] : memref<4x1x64xf32, #tpu.memory_space<vmem>>, vector<1x1x64xf32>
    %32 = vector.shape_cast %31 : vector<1x1x64xf32> to vector<1x64xf32>
    %33 = vector.broadcast %32 : vector<1x64xf32> to vector<16x64xf32>
    %34 = arith.addf %30, %33 : vector<16x64xf32>
    %35 = vector.extract_strided_slice %34 {offsets = [0, 0], sizes = [16, 32], strides = [1, 1]} : vector<16x64xf32> to vector<16x32xf32>
    %c0_31 = arith.constant 0 : index
    %c64 = arith.constant 64 : index
    %36 = vector.load %arg8[%c0_31, %c64] : memref<16x1026xf32, #tpu.memory_space<vmem>>, vector<16x32xf32>
    tpu.vector_store %arg8[%c0_31, %c64], %35 {strides = array<i32>} : memref<16x1026xf32, #tpu.memory_space<vmem>>, vector<16x32xf32>,
    %37 = vector.extract_strided_slice %34 {offsets = [0, 32], sizes = [16, 32], strides = [1, 1]} : vector<16x64xf32> to vector<16x32xf32>
    %c0_32 = arith.constant 0 : index
    %c577 = arith.constant 577 : index
    %38 = vector.load %arg8[%c0_32, %c577] : memref<16x1026xf32, #tpu.memory_space<vmem>>, vector<16x32xf32>
    tpu.vector_store %arg8[%c0_32, %c577], %37 {strides = array<i32>} : memref<16x1026xf32, #tpu.memory_space<vmem>>, vector<16x32xf32>,
    %c3 = arith.constant 3 : index
    %c0_33 = arith.constant 0 : index
    %c0_34 = arith.constant 0 : index
    %39 = vector.load %arg1[%c3, %c0_33, %c0_34] : memref<8x16x32xbf16, #tpu.memory_space<vmem>>, vector<1x16x32xbf16>
    %40 = vector.shape_cast %39 : vector<1x16x32xbf16> to vector<16x32xbf16>
    %c3_35 = arith.constant 3 : index
    %c0_36 = arith.constant 0 : index
    %c0_37 = arith.constant 0 : index
    %41 = vector.load %arg2[%c3_35, %c0_36, %c0_37] : memref<4x32x64xbf16, #tpu.memory_space<vmem>>, vector<1x32x64xbf16>
    %42 = vector.shape_cast %41 : vector<1x32x64xbf16> to vector<32x64xbf16>
    %cst_38 = arith.constant dense<0.000000e+00> : vector<16x64xf32>
    %43 = tpu.matmul %40, %42, %cst_38 {dimension_numbers = #tpu.dot_dimension_numbers<[1], [0], [0], [1], [0, 0, 1, 1], [], []>} : vector<16x32xbf16>, vector<32x64xbf16>, vector<16x64xf32> -> vector<16x64xf32>
    %c3_39 = arith.constant 3 : index
    %c0_40 = arith.constant 0 : index
    %c0_41 = arith.constant 0 : index
    %44 = vector.load %arg3[%c3_39, %c0_40, %c0_41] : memref<4x1x64xf32, #tpu.memory_space<vmem>>, vector<1x1x64xf32>
    %45 = vector.shape_cast %44 : vector<1x1x64xf32> to vector<1x64xf32>
    %46 = vector.broadcast %45 : vector<1x64xf32> to vector<16x64xf32>
    %47 = arith.addf %43, %46 : vector<16x64xf32>
    %48 = vector.extract_strided_slice %47 {offsets = [0, 0], sizes = [16, 32], strides = [1, 1]} : vector<16x64xf32> to vector<16x32xf32>
    %c0_42 = arith.constant 0 : index
    %c96 = arith.constant 96 : index
    %49 = vector.load %arg8[%c0_42, %c96] : memref<16x1026xf32, #tpu.memory_space<vmem>>, vector<16x32xf32>
    tpu.vector_store %arg8[%c0_42, %c96], %48 {strides = array<i32>} : memref<16x1026xf32, #tpu.memory_space<vmem>>, vector<16x32xf32>,
    %50 = vector.extract_strided_slice %47 {offsets = [0, 32], sizes = [16, 32], strides = [1, 1]} : vector<16x64xf32> to vector<16x32xf32>
    %c0_43 = arith.constant 0 : index
    %c609 = arith.constant 609 : index
    %51 = vector.load %arg8[%c0_43, %c609] : memref<16x1026xf32, #tpu.memory_space<vmem>>, vector<16x32xf32>
    tpu.vector_store %arg8[%c0_43, %c609], %50 {strides = array<i32>} : memref<16x1026xf32, #tpu.memory_space<vmem>>, vector<16x32xf32>,
    %c4 = arith.constant 4 : index
    %c0_44 = arith.constant 0 : index
    %c0_45 = arith.constant 0 : index
    %52 = vector.load %arg1[%c4, %c0_44, %c0_45] : memref<8x16x32xbf16, #tpu.memory_space<vmem>>, vector<1x16x32xbf16>
    %53 = vector.shape_cast %52 : vector<1x16x32xbf16> to vector<16x32xbf16>
    %c0_46 = arith.constant 0 : index
    %c0_47 = arith.constant 0 : index
    %c0_48 = arith.constant 0 : index
    %54 = vector.load %arg4[%c0_46, %c0_47, %c0_48] : memref<3x32x256xbf16, #tpu.memory_space<vmem>>, vector<1x32x256xbf16>
    %55 = vector.shape_cast %54 : vector<1x32x256xbf16> to vector<32x256xbf16>
    %cst_49 = arith.constant dense<0.000000e+00> : vector<16x256xf32>
    %56 = tpu.matmul %53, %55, %cst_49 {dimension_numbers = #tpu.dot_dimension_numbers<[1], [0], [0], [1], [0, 0, 1, 1], [], []>} : vector<16x32xbf16>, vector<32x256xbf16>, vector<16x256xf32> -> vector<16x256xf32>
    %c0_50 = arith.constant 0 : index
    %c0_51 = arith.constant 0 : index
    %c0_52 = arith.constant 0 : index
    %57 = vector.load %arg5[%c0_50, %c0_51, %c0_52] : memref<3x1x256xf32, #tpu.memory_space<vmem>>, vector<1x1x256xf32>
    %58 = vector.shape_cast %57 : vector<1x1x256xf32> to vector<1x256xf32>
    %59 = vector.broadcast %58 : vector<1x256xf32> to vector<16x256xf32>
    %60 = arith.addf %56, %59 : vector<16x256xf32>
    %61 = vector.extract_strided_slice %60 {offsets = [0, 0], sizes = [16, 128], strides = [1, 1]} : vector<16x256xf32> to vector<16x128xf32>
    %c0_53 = arith.constant 0 : index
    %c128 = arith.constant 128 : index
    %62 = vector.load %arg8[%c0_53, %c128] : memref<16x1026xf32, #tpu.memory_space<vmem>>, vector<16x128xf32>
    tpu.vector_store %arg8[%c0_53, %c128], %61 {strides = array<i32>} : memref<16x1026xf32, #tpu.memory_space<vmem>>, vector<16x128xf32>,
    %63 = vector.extract_strided_slice %60 {offsets = [0, 128], sizes = [16, 128], strides = [1, 1]} : vector<16x256xf32> to vector<16x128xf32>
    %c0_54 = arith.constant 0 : index
    %c641 = arith.constant 641 : index
    %64 = vector.load %arg8[%c0_54, %c641] : memref<16x1026xf32, #tpu.memory_space<vmem>>, vector<16x128xf32>
    tpu.vector_store %arg8[%c0_54, %c641], %63 {strides = array<i32>} : memref<16x1026xf32, #tpu.memory_space<vmem>>, vector<16x128xf32>,
    %c5 = arith.constant 5 : index
    %c0_55 = arith.constant 0 : index
    %c0_56 = arith.constant 0 : index
    %65 = vector.load %arg1[%c5, %c0_55, %c0_56] : memref<8x16x32xbf16, #tpu.memory_space<vmem>>, vector<1x16x32xbf16>
    %66 = vector.shape_cast %65 : vector<1x16x32xbf16> to vector<16x32xbf16>
    %c1_57 = arith.constant 1 : index
    %c0_58 = arith.constant 0 : index
    %c0_59 = arith.constant 0 : index
    %67 = vector.load %arg4[%c1_57, %c0_58, %c0_59] : memref<3x32x256xbf16, #tpu.memory_space<vmem>>, vector<1x32x256xbf16>
    %68 = vector.shape_cast %67 : vector<1x32x256xbf16> to vector<32x256xbf16>
    %cst_60 = arith.constant dense<0.000000e+00> : vector<16x256xf32>
    %69 = tpu.matmul %66, %68, %cst_60 {dimension_numbers = #tpu.dot_dimension_numbers<[1], [0], [0], [1], [0, 0, 1, 1], [], []>} : vector<16x32xbf16>, vector<32x256xbf16>, vector<16x256xf32> -> vector<16x256xf32>
    %c1_61 = arith.constant 1 : index
    %c0_62 = arith.constant 0 : index
    %c0_63 = arith.constant 0 : index
    %70 = vector.load %arg5[%c1_61, %c0_62, %c0_63] : memref<3x1x256xf32, #tpu.memory_space<vmem>>, vector<1x1x256xf32>
    %71 = vector.shape_cast %70 : vector<1x1x256xf32> to vector<1x256xf32>
    %72 = vector.broadcast %71 : vector<1x256xf32> to vector<16x256xf32>
    %73 = arith.addf %69, %72 : vector<16x256xf32>
    %74 = vector.extract_strided_slice %73 {offsets = [0, 0], sizes = [16, 128], strides = [1, 1]} : vector<16x256xf32> to vector<16x128xf32>
    %c0_64 = arith.constant 0 : index
    %c256 = arith.constant 256 : index
    %75 = vector.load %arg8[%c0_64, %c256] : memref<16x1026xf32, #tpu.memory_space<vmem>>, vector<16x128xf32>
    tpu.vector_store %arg8[%c0_64, %c256], %74 {strides = array<i32>} : memref<16x1026xf32, #tpu.memory_space<vmem>>, vector<16x128xf32>,
    %76 = vector.extract_strided_slice %73 {offsets = [0, 128], sizes = [16, 128], strides = [1, 1]} : vector<16x256xf32> to vector<16x128xf32>
    %c0_65 = arith.constant 0 : index
    %c769 = arith.constant 769 : index
    %77 = vector.load %arg8[%c0_65, %c769] : memref<16x1026xf32, #tpu.memory_space<vmem>>, vector<16x128xf32>
    tpu.vector_store %arg8[%c0_65, %c769], %76 {strides = array<i32>} : memref<16x1026xf32, #tpu.memory_space<vmem>>, vector<16x128xf32>,
    %c6 = arith.constant 6 : index
    %c0_66 = arith.constant 0 : index
    %c0_67 = arith.constant 0 : index
    %78 = vector.load %arg1[%c6, %c0_66, %c0_67] : memref<8x16x32xbf16, #tpu.memory_space<vmem>>, vector<1x16x32xbf16>
    %79 = vector.shape_cast %78 : vector<1x16x32xbf16> to vector<16x32xbf16>
    %c2_68 = arith.constant 2 : index
    %c0_69 = arith.constant 0 : index
    %c0_70 = arith.constant 0 : index
    %80 = vector.load %arg4[%c2_68, %c0_69, %c0_70] : memref<3x32x256xbf16, #tpu.memory_space<vmem>>, vector<1x32x256xbf16>
    %81 = vector.shape_cast %80 : vector<1x32x256xbf16> to vector<32x256xbf16>
    %cst_71 = arith.constant dense<0.000000e+00> : vector<16x256xf32>
    %82 = tpu.matmul %79, %81, %cst_71 {dimension_numbers = #tpu.dot_dimension_numbers<[1], [0], [0], [1], [0, 0, 1, 1], [], []>} : vector<16x32xbf16>, vector<32x256xbf16>, vector<16x256xf32> -> vector<16x256xf32>
    %c2_72 = arith.constant 2 : index
    %c0_73 = arith.constant 0 : index
    %c0_74 = arith.constant 0 : index
    %83 = vector.load %arg5[%c2_72, %c0_73, %c0_74] : memref<3x1x256xf32, #tpu.memory_space<vmem>>, vector<1x1x256xf32>
    %84 = vector.shape_cast %83 : vector<1x1x256xf32> to vector<1x256xf32>
    %85 = vector.broadcast %84 : vector<1x256xf32> to vector<16x256xf32>
    %86 = arith.addf %82, %85 : vector<16x256xf32>
    %87 = vector.extract_strided_slice %86 {offsets = [0, 0], sizes = [16, 128], strides = [1, 1]} : vector<16x256xf32> to vector<16x128xf32>
    %c0_75 = arith.constant 0 : index
    %c384 = arith.constant 384 : index
    %88 = vector.load %arg8[%c0_75, %c384] : memref<16x1026xf32, #tpu.memory_space<vmem>>, vector<16x128xf32>
    tpu.vector_store %arg8[%c0_75, %c384], %87 {strides = array<i32>} : memref<16x1026xf32, #tpu.memory_space<vmem>>, vector<16x128xf32>,
    %89 = vector.extract_strided_slice %86 {offsets = [0, 128], sizes = [16, 128], strides = [1, 1]} : vector<16x256xf32> to vector<16x128xf32>
    %c0_76 = arith.constant 0 : index
    %c897 = arith.constant 897 : index
    %90 = vector.load %arg8[%c0_76, %c897] : memref<16x1026xf32, #tpu.memory_space<vmem>>, vector<16x128xf32>
    tpu.vector_store %arg8[%c0_76, %c897], %89 {strides = array<i32>} : memref<16x1026xf32, #tpu.memory_space<vmem>>, vector<16x128xf32>,
    %c7 = arith.constant 7 : index
    %c0_77 = arith.constant 0 : index
    %c0_78 = arith.constant 0 : index
    %91 = vector.load %arg1[%c7, %c0_77, %c0_78] : memref<8x16x32xbf16, #tpu.memory_space<vmem>>, vector<1x16x32xbf16>
    %92 = vector.shape_cast %91 : vector<1x16x32xbf16> to vector<16x32xbf16>
    %c0_79 = arith.constant 0 : index
    %c0_80 = arith.constant 0 : index
    %c0_81 = arith.constant 0 : index
    %93 = vector.load %arg6[%c0_79, %c0_80, %c0_81] : memref<1x32x2xbf16, #tpu.memory_space<vmem>>, vector<1x32x2xbf16>
    %94 = vector.shape_cast %93 : vector<1x32x2xbf16> to vector<32x2xbf16>
    %cst_82 = arith.constant dense<0.000000e+00> : vector<16x2xf32>
    %95 = tpu.matmul %92, %94, %cst_82 {dimension_numbers = #tpu.dot_dimension_numbers<[1], [0], [0], [1], [0, 0, 1, 1], [], []>} : vector<16x32xbf16>, vector<32x2xbf16>, vector<16x2xf32> -> vector<16x2xf32>
    %c0_83 = arith.constant 0 : index
    %c0_84 = arith.constant 0 : index
    %c0_85 = arith.constant 0 : index
    %96 = vector.load %arg7[%c0_83, %c0_84, %c0_85] : memref<1x1x2xf32, #tpu.memory_space<vmem>>, vector<1x1x2xf32>
    %97 = vector.shape_cast %96 : vector<1x1x2xf32> to vector<1x2xf32>
    %98 = vector.broadcast %97 : vector<1x2xf32> to vector<16x2xf32>
    %99 = arith.addf %95, %98 : vector<16x2xf32>
    %100 = vector.extract_strided_slice %99 {offsets = [0, 0], sizes = [16, 1], strides = [1, 1]} : vector<16x2xf32> to vector<16x1xf32>
    %c0_86 = arith.constant 0 : index
    %c512 = arith.constant 512 : index
    %101 = vector.load %arg8[%c0_86, %c512] : memref<16x1026xf32, #tpu.memory_space<vmem>>, vector<16x1xf32>
    tpu.vector_store %arg8[%c0_86, %c512], %100 {strides = array<i32>} : memref<16x1026xf32, #tpu.memory_space<vmem>>, vector<16x1xf32>,
    %102 = vector.extract_strided_slice %99 {offsets = [0, 1], sizes = [16, 1], strides = [1, 1]} : vector<16x2xf32> to vector<16x1xf32>
    %c0_87 = arith.constant 0 : index
    %c1025 = arith.constant 1025 : index
    %103 = vector.load %arg8[%c0_87, %c1025] : memref<16x1026xf32, #tpu.memory_space<vmem>>, vector<16x1xf32>
    tpu.vector_store %arg8[%c0_87, %c1025], %102 {strides = array<i32>} : memref<16x1026xf32, #tpu.memory_space<vmem>>, vector<16x1xf32>,
    return
  }
  func.func @transform_0(%arg0: i32) -> (i32, i32, i32) {
    %c0_i32 = arith.constant 0 : i32
    %c0_i32_0 = arith.constant 0 : i32
    %c0_i32_1 = arith.constant 0 : i32
    return %c0_i32, %arg0, %c0_i32_0 : i32, i32, i32
  }
  func.func @transform_1(%arg0: i32) -> (i32, i32, i32) {
    %c0_i32 = arith.constant 0 : i32
    %c0_i32_0 = arith.constant 0 : i32
    %c0_i32_1 = arith.constant 0 : i32
    %c0_i32_2 = arith.constant 0 : i32
    return %c0_i32, %c0_i32_0, %c0_i32_1 : i32, i32, i32
  }
  func.func @transform_2(%arg0: i32) -> (i32, i32, i32) {
    %c0_i32 = arith.constant 0 : i32
    %c0_i32_0 = arith.constant 0 : i32
    %c0_i32_1 = arith.constant 0 : i32
    %c0_i32_2 = arith.constant 0 : i32
    return %c0_i32, %c0_i32_0, %c0_i32_1 : i32, i32, i32
  }
  func.func @transform_3(%arg0: i32) -> (i32, i32, i32) {
    %c0_i32 = arith.constant 0 : i32
    %c0_i32_0 = arith.constant 0 : i32
    %c0_i32_1 = arith.constant 0 : i32
    %c0_i32_2 = arith.constant 0 : i32
    return %c0_i32, %c0_i32_0, %c0_i32_1 : i32, i32, i32
  }
  func.func @transform_4(%arg0: i32) -> (i32, i32, i32) {
    %c0_i32 = arith.constant 0 : i32
    %c0_i32_0 = arith.constant 0 : i32
    %c0_i32_1 = arith.constant 0 : i32
    %c0_i32_2 = arith.constant 0 : i32
    return %c0_i32, %c0_i32_0, %c0_i32_1 : i32, i32, i32
  }
  func.func @transform_5(%arg0: i32) -> (i32, i32, i32) {
    %c0_i32 = arith.constant 0 : i32
    %c0_i32_0 = arith.constant 0 : i32
    %c0_i32_1 = arith.constant 0 : i32
    %c0_i32_2 = arith.constant 0 : i32
    return %c0_i32, %c0_i32_0, %c0_i32_1 : i32, i32, i32
  }
  func.func @transform_6(%arg0: i32) -> (i32, i32, i32) {
    %c0_i32 = arith.constant 0 : i32
    %c0_i32_0 = arith.constant 0 : i32
    %c0_i32_1 = arith.constant 0 : i32
    %c0_i32_2 = arith.constant 0 : i32
    return %c0_i32, %c0_i32_0, %c0_i32_1 : i32, i32, i32
  }
  func.func @transform_7(%arg0: i32) -> (i32, i32) {
    %c0_i32 = arith.constant 0 : i32
    %c0_i32_0 = arith.constant 0 : i32
    return %arg0, %c0_i32 : i32, i32
  }
}

</mosaic_0001>

<llo_original>
// kernel: tpu_custom_call.1
$region0: #{tpu_custom_call.1}
  #allocation0 [shape = 'u32[]', space=smem, size = 0x4, offset = 0x4, fixed_abs, tag = 'smem constant byte address 0x4 - core index']
  #allocation1 [shape = 'u32[144,128]{1,0:T(1,128)}', space=vmem, size = 0x12000, scoped, tag = 'internal scratch']
  %s0 = inlined_call_operand.hbm [shape: bf16[8,16,32], index: 0, kind: input, shape index: {}]
  %s1 = inlined_call_operand.hbm [shape: bf16[4,32,64], index: 1, kind: input, shape index: {}]
  %s2 = inlined_call_operand.vmem [shape: f32[4,1,64], index: 2, kind: input, shape index: {}]
  %s3 = inlined_call_operand.hbm [shape: bf16[3,32,256], index: 3, kind: input, shape index: {}]
  %s4 = inlined_call_operand.vmem [shape: f32[3,1,256], index: 4, kind: input, shape index: {}]
  %s5 = inlined_call_operand.vmem [shape: bf16[1,32,2], index: 5, kind: input, shape index: {}]
  %s6 = inlined_call_operand.vmem [shape: f32[1,1,2], index: 6, kind: input, shape index: {}]
  %s7 = inlined_call_operand.hbm [shape: f32[16,1026], index: 7, kind: output, shape index: {}]
  %s8 = sld [smem:[#allocation0]]
  $region50: #{tpu_custom_call.1} parent=0
    _
  %s10 = ssub.s32 1, %s8
  %s11 = scalar_select 0, %s10, %s8
  $region1: #{tpu_custom_call.1} parent=0
    #allocation2 [shape = 'u8[32768]{0}', space=vmem, size = 0x8000, scoped, tag = 'input window, operand 0, single buffered']
    #allocation3 [shape = 's32[1]{0}', space=sflag, size = 0x4, scoped, tag = 'scoped memory for tpu_custom_call.1']
    #allocation4 [shape = 's32[1]{0}', space=sflag, size = 0x4, scoped, tag = 'scoped memory for tpu_custom_call.1']
    #allocation5 [shape = 'u8[32768]{0}', space=vmem, size = 0x8000, scoped, tag = 'input window, operand 1, single buffered']
    #allocation6 [shape = 's32[1]{0}', space=sflag, size = 0x4, scoped, tag = 'scoped memory for tpu_custom_call.1']
    #allocation7 [shape = 'u8[49152]{0}', space=vmem, size = 0xc000, scoped, tag = 'input window, operand 3, single buffered']
    #allocation8 [shape = 'u8[73728]{0}', space=vmem, size = 0x12000, scoped, tag = 'output window, operand 0, single buffered']
    %12 = vsyncpa [#allocation3], 0
    %13 = vsyncpa [#allocation6], 0
    %14 = vsyncpa [#allocation4], 0
    // Predicated region
    $region2: #{tpu_custom_call.1} parent=1 // pred_check
      _
    $region3: #{tpu_custom_call.1} parent=1 // pred_check_branch
      %16 = sbr.rel (0) target = $region5
    $region4: #{tpu_custom_call.1} parent=1 // pred_region
      %s18 = ssub.s32 1024, 1024
      %19 = vsyncadd [#allocation3], %s18
      %s20 = sshll.u32 [#allocation2], 4
      %s21 = int_to_ptr.vmem [resolvable:$true] %s20
      %26 = dma.hbm_to_vmem [thread:$0]  %s0, 1024, %s21, [#allocation3], 64, 64, 4
    $region5: #{tpu_custom_call.1} parent=1 // pred_fallthru
      _
    // Predicated region
    $region6: #{tpu_custom_call.1} parent=1 // pred_check
      _
    $region7: #{tpu_custom_call.1} parent=1 // pred_check_branch
      %28 = sbr.rel (0) target = $region9
    $region8: #{tpu_custom_call.1} parent=1 // pred_region
      %s30 = ssub.s32 1024, 1024
      %31 = vsyncadd [#allocation6], %s30
      %s32 = sshll.u32 [#allocation5], 4
      %s33 = int_to_ptr.vmem [resolvable:$true] %s32
      %38 = dma.hbm_to_vmem [thread:$0]  %s1, 1024, %s33, [#allocation6], 64, 64, 4
    $region9: #{tpu_custom_call.1} parent=1 // pred_fallthru
      _
    // Predicated region
    $region10: #{tpu_custom_call.1} parent=1 // pred_check
      _
    $region11: #{tpu_custom_call.1} parent=1 // pred_check_branch
      %40 = sbr.rel (0) target = $region13
    $region12: #{tpu_custom_call.1} parent=1 // pred_region
      _
    $region13: #{tpu_custom_call.1} parent=1 // pred_fallthru
      _
    // Predicated region
    $region14: #{tpu_custom_call.1} parent=1 // pred_check
      _
    $region15: #{tpu_custom_call.1} parent=1 // pred_check_branch
      %42 = sbr.rel (0) target = $region17
    $region16: #{tpu_custom_call.1} parent=1 // pred_region
      %s44 = ssub.s32 1536, 1536
      %45 = vsyncadd [#allocation6], %s44
      %s46 = sshll.u32 [#allocation7], 4
      %s47 = int_to_ptr.vmem [resolvable:$true] %s46
      %52 = dma.hbm_to_vmem [thread:$0]  %s3, 1536, %s47, [#allocation6], 128, 128, 8
    $region17: #{tpu_custom_call.1} parent=1 // pred_fallthru
      _
    // Predicated region
    $region18: #{tpu_custom_call.1} parent=1 // pred_check
      _
    $region19: #{tpu_custom_call.1} parent=1 // pred_check_branch
      %54 = sbr.rel (0) target = $region21
    $region20: #{tpu_custom_call.1} parent=1 // pred_region
      _
    $region21: #{tpu_custom_call.1} parent=1 // pred_fallthru
      _
    // Predicated region
    $region22: #{tpu_custom_call.1} parent=1 // pred_check
      _
    $region23: #{tpu_custom_call.1} parent=1 // pred_check_branch
      %56 = sbr.rel (0) target = $region25
    $region24: #{tpu_custom_call.1} parent=1 // pred_region
      _
    $region25: #{tpu_custom_call.1} parent=1 // pred_fallthru
      _
    // Predicated region
    $region26: #{tpu_custom_call.1} parent=1 // pred_check
      _
    $region27: #{tpu_custom_call.1} parent=1 // pred_check_branch
      %58 = sbr.rel (0) target = $region29
    $region28: #{tpu_custom_call.1} parent=1 // pred_region
      _
    $region29: #{tpu_custom_call.1} parent=1 // pred_fallthru
      _
    // Predicated region
    $region30: #{tpu_custom_call.1} parent=1 // pred_check
      _
    $region31: #{tpu_custom_call.1} parent=1 // pred_check_branch
      %60 = sbr.rel (0) target = $region33
    $region32: #{tpu_custom_call.1} parent=1 // pred_region
      %61 = dma.done [#allocation3], 1024
    $region33: #{tpu_custom_call.1} parent=1 // pred_fallthru
      _
    // Predicated region
    $region34: #{tpu_custom_call.1} parent=1 // pred_check
      _
    $region35: #{tpu_custom_call.1} parent=1 // pred_check_branch
      %63 = sbr.rel (0) target = $region37
    $region36: #{tpu_custom_call.1} parent=1 // pred_region
      %64 = dma.done [#allocation6], 1024
    $region37: #{tpu_custom_call.1} parent=1 // pred_fallthru
      _
    // Predicated region
    $region38: #{tpu_custom_call.1} parent=1 // pred_check
      _
    $region39: #{tpu_custom_call.1} parent=1 // pred_check_branch
      %66 = sbr.rel (0) target = $region41
    $region40: #{tpu_custom_call.1} parent=1 // pred_region
      %67 = dma.done [#allocation6], 1536
    $region41: #{tpu_custom_call.1} parent=1 // pred_fallthru
      _
    %v69 = vld [vmem:[#allocation2] sm:$0xf]
    %v70 = vld [vmem:[#allocation2 + $0x4] sm:$0xf]
    %v71 = vld [vmem:[#allocation5] sm:$0xf]
    %v72 = vld [vmem:[#allocation5 + $0x4] sm:$0xf]
    %v73 = vld [vmem:[#allocation5 + $0x8] sm:$0xf]
    %v74 = vld [vmem:[#allocation5 + $0xc] sm:$0xf]
    %v75 = vld [vmem:[%s2] sm:$0x1]
    %v77 = vlaneseq
    %v78 = vshrl.u32 %v77, 7
    %v79 = vsub.s32 0, %v78
    %v80 = vrot.slane %v75, %v79
    %v84 = vunpack.c.l.b16 %v69
    %v85 = vunpack.c.l.b16 %v70
    %v86 = vpack.c.b16 %v85, %v84
    %v91 = vunpack.c.l.b16 %v71
    %v92 = vunpack.c.l.b16 %v72
    %v93 = vunpack.c.l.b16 %v73
    %v94 = vunpack.c.l.b16 %v74
    %v95 = vpack.c.b16 %v92, %v91
    %v96 = vpack.c.b16 %v94, %v93
    %vm99 = vcmask 261120
    %v101 = vsel %vm99, %v86, 0
    %103 = vmatprep.subr.bf16.mxu0 0
    %104 = vmatpush1.bf16.msra.mxu0 %v95
    %105 = vmatprep.subr.bf16.mxu0 0
    %106 = vmatpush1.bf16.msra.mxu0 %v96
    %107 = vmatprep.subr.bf16.mxu0 0
    %108 = vmatpush1.bf16.msra.mxu0 0
    %109 = vmatprep.subr.bf16.mxu0 0
    %110 = vmatpush1.bf16.msra.mxu0 0
    %111 = vmatprep.subr.bf16.mxu0 0
    %112 = vmatpush1.bf16.msra.mxu0 0
    %113 = vmatprep.subr.bf16.mxu0 0
    %114 = vmatpush1.bf16.msra.mxu0 0
    %115 = vmatprep.subr.bf16.mxu0 0
    %116 = vmatpush1.bf16.msra.mxu0 0
    %117 = vmatprep.subr.bf16.mxu0 0
    %118 = vmatpush1.bf16.msra.mxu0 0
    %119 = vmatprep.subr.bf16.mxu0 0
    %120 = vmatpush1.bf16.msra.mxu0 0
    %121 = vmatprep.subr.bf16.mxu0 0
    %122 = vmatpush1.bf16.msra.mxu0 0
    %123 = vmatprep.subr.bf16.mxu0 0
    %124 = vmatpush1.bf16.msra.mxu0 0
    %125 = vmatprep.subr.bf16.mxu0 0
    %126 = vmatpush1.bf16.msra.mxu0 0
    %127 = vmatprep.subr.bf16.mxu0 0
    %128 = vmatpush1.bf16.msra.mxu0 0
    %129 = vmatprep.subr.bf16.mxu0 0
    %130 = vmatpush1.bf16.msra.mxu0 0
    %131 = vmatprep.subr.bf16.mxu0 0
    %132 = vmatpush1.bf16.msra.mxu0 0
    %133 = vmatprep.subr.bf16.mxu0 0
    %134 = vmatpush1.bf16.msra.mxu0 0
    %135 = vmatprep.mubr.bf16.mxu0 0
    %136 = vmatmul.mubr.bf16.gmra.mrb[0].mxu0 %v101
    %v137 = vpop.f32.mrb[0].mxu0
    %v138 = vadd.f32 %v80, %v137
    %v139 = vpop.f32.mrb[0].mxu0
    %v140 = vpop.f32.mrb[0].mxu0
    %v141 = vadd.f32 %v80, %v140
    %v142 = vpop.f32.mrb[0].mxu0
    %143 = vdwg.mxu0
    %144 = vst.msk [vmem:[#allocation8] sm:$0xff] %vm99, %v138
    %145 = vst.msk [vmem:[#allocation8 + $0x48] sm:$0xff] %vm99, %v141
    %148 = vrot.lane.b32.xlu0 %v138, 97
    %v149 = vpop.permute.xlu0 %148
    %150 = vrot.lane.b32.xlu0 %v141, 97
    %v151 = vpop.permute.xlu0 %150
    %vm154 = vcmask 269320
    %155 = vst.msk [vmem:[#allocation8 + $0x20] sm:$0xff] %vm154, %v149
    %156 = vst.msk [vmem:[#allocation8 + $0x68] sm:$0xff] %vm154, %v151
    %s157 = scalar_lea.vmem [#allocation2], 8
    %v158 = vld [vmem:[%s157] sm:$0xf]
    %v159 = vld [vmem:[%s157 + $0x4] sm:$0xf]
    %s160 = scalar_lea.vmem [#allocation5], 16
    %v161 = vld [vmem:[%s160] sm:$0xf]
    %v162 = vld [vmem:[%s160 + $0x4] sm:$0xf]
    %v163 = vld [vmem:[%s160 + $0x8] sm:$0xf]
    %v164 = vld [vmem:[%s160 + $0xc] sm:$0xf]
    %s165 = scalar_lea.vmem %s2, 1
    %v166 = vld [vmem:[%s165] sm:$0x1]
    %v168 = vlaneseq
    %v169 = vshrl.u32 %v168, 7
    %v170 = vsub.s32 0, %v169
    %v171 = vrot.slane %v166, %v170
    %v175 = vunpack.c.l.b16 %v158
    %v176 = vunpack.c.l.b16 %v159
    %v177 = vpack.c.b16 %v176, %v175
    %v182 = vunpack.c.l.b16 %v161
    %v183 = vunpack.c.l.b16 %v162
    %v184 = vunpack.c.l.b16 %v163
    %v185 = vunpack.c.l.b16 %v164
    %v186 = vpack.c.b16 %v183, %v182
    %v187 = vpack.c.b16 %v185, %v184
    %v191 = vsel %vm99, %v177, 0
    %193 = vmatprep.subr.bf16.mxu0 0
    %194 = vmatpush1.bf16.msra.mxu0 %v186
    %195 = vmatprep.subr.bf16.mxu0 0
    %196 = vmatpush1.bf16.msra.mxu0 %v187
    %197 = vmatprep.subr.bf16.mxu0 0
    %198 = vmatpush1.bf16.msra.mxu0 0
    %199 = vmatprep.subr.bf16.mxu0 0
    %200 = vmatpush1.bf16.msra.mxu0 0
    %201 = vmatprep.subr.bf16.mxu0 0
    %202 = vmatpush1.bf16.msra.mxu0 0
    %203 = vmatprep.subr.bf16.mxu0 0
    %204 = vmatpush1.bf16.msra.mxu0 0
    %205 = vmatprep.subr.bf16.mxu0 0
    %206 = vmatpush1.bf16.msra.mxu0 0
    %207 = vmatprep.subr.bf16.mxu0 0
    %208 = vmatpush1.bf16.msra.mxu0 0
    %209 = vmatprep.subr.bf16.mxu0 0
    %210 = vmatpush1.bf16.msra.mxu0 0
    %211 = vmatprep.subr.bf16.mxu0 0
    %212 = vmatpush1.bf16.msra.mxu0 0
    %213 = vmatprep.subr.bf16.mxu0 0
    %214 = vmatpush1.bf16.msra.mxu0 0
    %215 = vmatprep.subr.bf16.mxu0 0
    %216 = vmatpush1.bf16.msra.mxu0 0
    %217 = vmatprep.subr.bf16.mxu0 0
    %218 = vmatpush1.bf16.msra.mxu0 0
    %219 = vmatprep.subr.bf16.mxu0 0
    %220 = vmatpush1.bf16.msra.mxu0 0
    %221 = vmatprep.subr.bf16.mxu0 0
    %222 = vmatpush1.bf16.msra.mxu0 0
    %223 = vmatprep.subr.bf16.mxu0 0
    %224 = vmatpush1.bf16.msra.mxu0 0
    %225 = vmatprep.mubr.bf16.mxu0 0
    %226 = vmatmul.mubr.bf16.gmra.mrb[0].mxu0 %v191
    %v227 = vpop.f32.mrb[0].mxu0
    %v228 = vadd.f32 %v171, %v227
    %v229 = vpop.f32.mrb[0].mxu0
    %v230 = vpop.f32.mrb[0].mxu0
    %v231 = vadd.f32 %v171, %v230
    %v232 = vpop.f32.mrb[0].mxu0
    %233 = vdwg.mxu0
    %236 = vrot.lane.b32.xlu0 %v228, 32
    %v237 = vpop.permute.xlu0 %236
    %238 = vrot.lane.b32.xlu0 %v231, 32
    %v239 = vpop.permute.xlu0 %238
    %vm242 = vcmask 523520
    %243 = vst.msk [vmem:[#allocation8] sm:$0xff] %vm242, %v237
    %244 = vst.msk [vmem:[#allocation8 + $0x48] sm:$0xff] %vm242, %v239
    %245 = vrot.lane.b32.xlu0 %v228, 1
    %v246 = vpop.permute.xlu0 %245
    %247 = vrot.lane.b32.xlu0 %v231, 1
    %v248 = vpop.permute.xlu0 %247
    %vm251 = vcmask 531720
    %252 = vst.msk [vmem:[#allocation8 + $0x20] sm:$0xff] %vm251, %v246
    %253 = vst.msk [vmem:[#allocation8 + $0x68] sm:$0xff] %vm251, %v248
    %s254 = scalar_lea.vmem [#allocation2], 16
    %v255 = vld [vmem:[%s254] sm:$0xf]
    %v256 = vld [vmem:[%s254 + $0x4] sm:$0xf]
    %s257 = scalar_lea.vmem [#allocation5], 32
    %v258 = vld [vmem:[%s257] sm:$0xf]
    %v259 = vld [vmem:[%s257 + $0x4] sm:$0xf]
    %v260 = vld [vmem:[%s257 + $0x8] sm:$0xf]
    %v261 = vld [vmem:[%s257 + $0xc] sm:$0xf]
    %s262 = scalar_lea.vmem %s2, 2
    %v263 = vld [vmem:[%s262] sm:$0x1]
    %v265 = vlaneseq
    %v266 = vshrl.u32 %v265, 7
    %v267 = vsub.s32 0, %v266
    %v268 = vrot.slane %v263, %v267
    %v272 = vunpack.c.l.b16 %v255
    %v273 = vunpack.c.l.b16 %v256
    %v274 = vpack.c.b16 %v273, %v272
    %v279 = vunpack.c.l.b16 %v258
    %v280 = vunpack.c.l.b16 %v259
    %v281 = vunpack.c.l.b16 %v260
    %v282 = vunpack.c.l.b16 %v261
    %v283 = vpack.c.b16 %v280, %v279
    %v284 = vpack.c.b16 %v282, %v281
    %v288 = vsel %vm99, %v274, 0
    %290 = vmatprep.subr.bf16.mxu0 0
    %291 = vmatpush1.bf16.msra.mxu0 %v283
    %292 = vmatprep.subr.bf16.mxu0 0
    %293 = vmatpush1.bf16.msra.mxu0 %v284
    %294 = vmatprep.subr.bf16.mxu0 0
    %295 = vmatpush1.bf16.msra.mxu0 0
    %296 = vmatprep.subr.bf16.mxu0 0
    %297 = vmatpush1.bf16.msra.mxu0 0
    %298 = vmatprep.subr.bf16.mxu0 0
    %299 = vmatpush1.bf16.msra.mxu0 0
    %300 = vmatprep.subr.bf16.mxu0 0
    %301 = vmatpush1.bf16.msra.mxu0 0
    %302 = vmatprep.subr.bf16.mxu0 0
    %303 = vmatpush1.bf16.msra.mxu0 0
    %304 = vmatprep.subr.bf16.mxu0 0
    %305 = vmatpush1.bf16.msra.mxu0 0
    %306 = vmatprep.subr.bf16.mxu0 0
    %307 = vmatpush1.bf16.msra.mxu0 0
    %308 = vmatprep.subr.bf16.mxu0 0
    %309 = vmatpush1.bf16.msra.mxu0 0
    %310 = vmatprep.subr.bf16.mxu0 0
    %311 = vmatpush1.bf16.msra.mxu0 0
    %312 = vmatprep.subr.bf16.mxu0 0
    %313 = vmatpush1.bf16.msra.mxu0 0
    %314 = vmatprep.subr.bf16.mxu0 0
    %315 = vmatpush1.bf16.msra.mxu0 0
    %316 = vmatprep.subr.bf16.mxu0 0
    %317 = vmatpush1.bf16.msra.mxu0 0
    %318 = vmatprep.subr.bf16.mxu0 0
    %319 = vmatpush1.bf16.msra.mxu0 0
    %320 = vmatprep.subr.bf16.mxu0 0
    %321 = vmatpush1.bf16.msra.mxu0 0
    %322 = vmatprep.mubr.bf16.mxu0 0
    %323 = vmatmul.mubr.bf16.gmra.mrb[0].mxu0 %v288
    %v324 = vpop.f32.mrb[0].mxu0
    %v325 = vadd.f32 %v268, %v324
    %v326 = vpop.f32.mrb[0].mxu0
    %v327 = vpop.f32.mrb[0].mxu0
    %v328 = vadd.f32 %v268, %v327
    %v329 = vpop.f32.mrb[0].mxu0
    %330 = vdwg.mxu0
    %333 = vrot.lane.b32.xlu0 %v325, 64
    %v334 = vpop.permute.xlu0 %333
    %335 = vrot.lane.b32.xlu0 %v328, 64
    %v336 = vpop.permute.xlu0 %335
    %vm339 = vcmask 785920
    %340 = vst.msk [vmem:[#allocation8] sm:$0xff] %vm339, %v334
    %341 = vst.msk [vmem:[#allocation8 + $0x48] sm:$0xff] %vm339, %v336
    %342 = vrot.lane.b32.xlu0 %v325, 33
    %v343 = vpop.permute.xlu0 %342
    %344 = vrot.lane.b32.xlu0 %v328, 33
    %v345 = vpop.permute.xlu0 %344
    %vm348 = vcmask 794120
    %349 = vst.msk [vmem:[#allocation8 + $0x20] sm:$0xff] %vm348, %v343
    %350 = vst.msk [vmem:[#allocation8 + $0x68] sm:$0xff] %vm348, %v345
    %s351 = scalar_lea.vmem [#allocation2], 24
    %v352 = vld [vmem:[%s351] sm:$0xf]
    %v353 = vld [vmem:[%s351 + $0x4] sm:$0xf]
    %s354 = scalar_lea.vmem [#allocation5], 48
    %v355 = vld [vmem:[%s354] sm:$0xf]
    %v356 = vld [vmem:[%s354 + $0x4] sm:$0xf]
    %v357 = vld [vmem:[%s354 + $0x8] sm:$0xf]
    %v358 = vld [vmem:[%s354 + $0xc] sm:$0xf]
    %s359 = scalar_lea.vmem %s2, 3
    %v360 = vld [vmem:[%s359] sm:$0x1]
    %v362 = vlaneseq
    %v363 = vshrl.u32 %v362, 7
    %v364 = vsub.s32 0, %v363
    %v365 = vrot.slane %v360, %v364
    %v369 = vunpack.c.l.b16 %v352
    %v370 = vunpack.c.l.b16 %v353
    %v371 = vpack.c.b16 %v370, %v369
    %v376 = vunpack.c.l.b16 %v355
    %v377 = vunpack.c.l.b16 %v356
    %v378 = vunpack.c.l.b16 %v357
    %v379 = vunpack.c.l.b16 %v358
    %v380 = vpack.c.b16 %v377, %v376
    %v381 = vpack.c.b16 %v379, %v378
    %v385 = vsel %vm99, %v371, 0
    %387 = vmatprep.subr.bf16.mxu0 0
    %388 = vmatpush1.bf16.msra.mxu0 %v380
    %389 = vmatprep.subr.bf16.mxu0 0
    %390 = vmatpush1.bf16.msra.mxu0 %v381
    %391 = vmatprep.subr.bf16.mxu0 0
    %392 = vmatpush1.bf16.msra.mxu0 0
    %393 = vmatprep.subr.bf16.mxu0 0
    %394 = vmatpush1.bf16.msra.mxu0 0
    %395 = vmatprep.subr.bf16.mxu0 0
    %396 = vmatpush1.bf16.msra.mxu0 0
    %397 = vmatprep.subr.bf16.mxu0 0
    %398 = vmatpush1.bf16.msra.mxu0 0
    %399 = vmatprep.subr.bf16.mxu0 0
    %400 = vmatpush1.bf16.msra.mxu0 0
    %401 = vmatprep.subr.bf16.mxu0 0
    %402 = vmatpush1.bf16.msra.mxu0 0
    %403 = vmatprep.subr.bf16.mxu0 0
    %404 = vmatpush1.bf16.msra.mxu0 0
    %405 = vmatprep.subr.bf16.mxu0 0
    %406 = vmatpush1.bf16.msra.mxu0 0
    %407 = vmatprep.subr.bf16.mxu0 0
    %408 = vmatpush1.bf16.msra.mxu0 0
    %409 = vmatprep.subr.bf16.mxu0 0
    %410 = vmatpush1.bf16.msra.mxu0 0
    %411 = vmatprep.subr.bf16.mxu0 0
    %412 = vmatpush1.bf16.msra.mxu0 0
    %413 = vmatprep.subr.bf16.mxu0 0
    %414 = vmatpush1.bf16.msra.mxu0 0
    %415 = vmatprep.subr.bf16.mxu0 0
    %416 = vmatpush1.bf16.msra.mxu0 0
    %417 = vmatprep.subr.bf16.mxu0 0
    %418 = vmatpush1.bf16.msra.mxu0 0
    %419 = vmatprep.mubr.bf16.mxu0 0
    %420 = vmatmul.mubr.bf16.gmra.mrb[0].mxu0 %v385
    %v421 = vpop.f32.mrb[0].mxu0
    %v422 = vadd.f32 %v365, %v421
    %v423 = vpop.f32.mrb[0].mxu0
    %v424 = vpop.f32.mrb[0].mxu0
    %v425 = vadd.f32 %v365, %v424
    %v426 = vpop.f32.mrb[0].mxu0
    %427 = vdwg.mxu0
    %430 = vrot.lane.b32.xlu0 %v422, 96
    %v431 = vpop.permute.xlu0 %430
    %432 = vrot.lane.b32.xlu0 %v425, 96
    %v433 = vpop.permute.xlu0 %432
    %vm436 = vcmask 1048320
    %437 = vst.msk [vmem:[#allocation8] sm:$0xff] %vm436, %v431
    %438 = vst.msk [vmem:[#allocation8 + $0x48] sm:$0xff] %vm436, %v433
    %439 = vrot.lane.b32.xlu0 %v422, 65
    %v440 = vpop.permute.xlu0 %439
    %441 = vrot.lane.b32.xlu0 %v425, 65
    %v442 = vpop.permute.xlu0 %441
    %vm445 = vcmask 1048328
    %446 = vst.msk [vmem:[#allocation8 + $0x20] sm:$0xff] %vm445, %v440
    %vm447 = vcmask 7168
    %448 = vst.msk [vmem:[#allocation8 + $0x28] sm:$0xff] %vm447, %v440
    %449 = vst.msk [vmem:[#allocation8 + $0x68] sm:$0xff] %vm445, %v442
    %450 = vst.msk [vmem:[#allocation8 + $0x70] sm:$0xff] %vm447, %v442
    %s451 = scalar_lea.vmem [#allocation2], 32
    %v452 = vld [vmem:[%s451] sm:$0xf]
    %v453 = vld [vmem:[%s451 + $0x4] sm:$0xf]
    %v454 = vld [vmem:[#allocation7] sm:$0xff]
    %v455 = vld [vmem:[#allocation7 + $0x8] sm:$0xff]
    %v456 = vld [vmem:[#allocation7 + $0x10] sm:$0xff]
    %v457 = vld [vmem:[#allocation7 + $0x18] sm:$0xff]
    %v458 = vld [vmem:[%s4] sm:$0x3]
    %v460 = vlaneseq
    %v461 = vshrl.u32 %v460, 7
    %v462 = vsub.s32 0, %v461
    %v463 = vrot.slane %v458, %v462
    %v464 = vlaneseq
    %v465 = vshrl.u32 %v464, 7
    %v466 = vsub.s32 1, %v465
    %v467 = vrot.slane %v458, %v466
    %v472 = vunpack.c.l.b16 %v452
    %v473 = vunpack.c.l.b16 %v453
    %v474 = vpack.c.b16 %v473, %v472
    %v479 = vunpack.c.l.b16 %v454
    %v480 = vunpack.c.h.b16 %v454
    %v481 = vunpack.c.l.b16 %v455
    %v482 = vunpack.c.h.b16 %v455
    %v483 = vunpack.c.l.b16 %v456
    %v484 = vunpack.c.h.b16 %v456
    %v485 = vunpack.c.l.b16 %v457
    %v486 = vunpack.c.h.b16 %v457
    %v487 = vpack.c.b16 %v481, %v479
    %v488 = vpack.c.b16 %v482, %v480
    %v489 = vpack.c.b16 %v485, %v483
    %v490 = vpack.c.b16 %v486, %v484
    %v496 = vsel %vm99, %v474, 0
    %498 = vmatprep.subr.bf16.mxu0 %v488
    %499 = vmatpush1.bf16.msra.mxu0 %v487
    %500 = vmatprep.subr.bf16.mxu0 %v490
    %501 = vmatpush1.bf16.msra.mxu0 %v489
    %502 = vmatprep.subr.bf16.mxu0 0
    %503 = vmatpush1.bf16.msra.mxu0 0
    %504 = vmatprep.subr.bf16.mxu0 0
    %505 = vmatpush1.bf16.msra.mxu0 0
    %506 = vmatprep.subr.bf16.mxu0 0
    %507 = vmatpush1.bf16.msra.mxu0 0
    %508 = vmatprep.subr.bf16.mxu0 0
    %509 = vmatpush1.bf16.msra.mxu0 0
    %510 = vmatprep.subr.bf16.mxu0 0
    %511 = vmatpush1.bf16.msra.mxu0 0
    %512 = vmatprep.subr.bf16.mxu0 0
    %513 = vmatpush1.bf16.msra.mxu0 0
    %514 = vmatprep.subr.bf16.mxu0 0
    %515 = vmatpush1.bf16.msra.mxu0 0
    %516 = vmatprep.subr.bf16.mxu0 0
    %517 = vmatpush1.bf16.msra.mxu0 0
    %518 = vmatprep.subr.bf16.mxu0 0
    %519 = vmatpush1.bf16.msra.mxu0 0
    %520 = vmatprep.subr.bf16.mxu0 0
    %521 = vmatpush1.bf16.msra.mxu0 0
    %522 = vmatprep.subr.bf16.mxu0 0
    %523 = vmatpush1.bf16.msra.mxu0 0
    %524 = vmatprep.subr.bf16.mxu0 0
    %525 = vmatpush1.bf16.msra.mxu0 0
    %526 = vmatprep.subr.bf16.mxu0 0
    %527 = vmatpush1.bf16.msra.mxu0 0
    %528 = vmatprep.subr.bf16.mxu0 0
    %529 = vmatpush1.bf16.msra.mxu0 0
    %530 = vmatprep.mubr.bf16.mxu0 0
    %531 = vmatmul.mubr.bf16.gmra.mrb[0].mxu0 %v496
    %v532 = vpop.f32.mrb[0].mxu0
    %v533 = vadd.f32 %v463, %v532
    %v534 = vpop.f32.mrb[0].mxu0
    %v535 = vadd.f32 %v467, %v534
    %v536 = vpop.f32.mrb[0].mxu0
    %v537 = vadd.f32 %v463, %v536
    %v538 = vpop.f32.mrb[0].mxu0
    %v539 = vadd.f32 %v467, %v538
    %540 = vdwg.mxu0
    %541 = vst [vmem:[#allocation8 + $0x8] sm:$0xff] %v533
    %542 = vst [vmem:[#allocation8 + $0x50] sm:$0xff] %v537
    %545 = vrot.lane.b32.xlu0 %v535, 1
    %v546 = vpop.permute.xlu0 %545
    %547 = vrot.lane.b32.xlu0 %v539, 1
    %v548 = vpop.permute.xlu0 %547
    %vm551 = vcmask 1047560
    %552 = vst.msk [vmem:[#allocation8 + $0x28] sm:$0xff] %vm551, %v546
    %553 = vst.msk [vmem:[#allocation8 + $0x30] sm:$0xff] %vm447, %v546
    %554 = vst.msk [vmem:[#allocation8 + $0x70] sm:$0xff] %vm551, %v548
    %555 = vst.msk [vmem:[#allocation8 + $0x78] sm:$0xff] %vm447, %v548
    %s556 = scalar_lea.vmem [#allocation2], 40
    %v557 = vld [vmem:[%s556] sm:$0xf]
    %v558 = vld [vmem:[%s556 + $0x4] sm:$0xf]
    %s559 = scalar_lea.vmem [#allocation7], 32
    %v560 = vld [vmem:[%s559] sm:$0xff]
    %v561 = vld [vmem:[%s559 + $0x8] sm:$0xff]
    %v562 = vld [vmem:[%s559 + $0x10] sm:$0xff]
    %v563 = vld [vmem:[%s559 + $0x18] sm:$0xff]
    %s564 = scalar_lea.vmem %s4, 2
    %v565 = vld [vmem:[%s564] sm:$0x3]
    %v567 = vlaneseq
    %v568 = vshrl.u32 %v567, 7
    %v569 = vsub.s32 0, %v568
    %v570 = vrot.slane %v565, %v569
    %v571 = vlaneseq
    %v572 = vshrl.u32 %v571, 7
    %v573 = vsub.s32 1, %v572
    %v574 = vrot.slane %v565, %v573
    %v579 = vunpack.c.l.b16 %v557
    %v580 = vunpack.c.l.b16 %v558
    %v581 = vpack.c.b16 %v580, %v579
    %v586 = vunpack.c.l.b16 %v560
    %v587 = vunpack.c.h.b16 %v560
    %v588 = vunpack.c.l.b16 %v561
    %v589 = vunpack.c.h.b16 %v561
    %v590 = vunpack.c.l.b16 %v562
    %v591 = vunpack.c.h.b16 %v562
    %v592 = vunpack.c.l.b16 %v563
    %v593 = vunpack.c.h.b16 %v563
    %v594 = vpack.c.b16 %v588, %v586
    %v595 = vpack.c.b16 %v589, %v587
    %v596 = vpack.c.b16 %v592, %v590
    %v597 = vpack.c.b16 %v593, %v591
    %v603 = vsel %vm99, %v581, 0
    %605 = vmatprep.subr.bf16.mxu0 %v595
    %606 = vmatpush1.bf16.msra.mxu0 %v594
    %607 = vmatprep.subr.bf16.mxu0 %v597
    %608 = vmatpush1.bf16.msra.mxu0 %v596
    %609 = vmatprep.subr.bf16.mxu0 0
    %610 = vmatpush1.bf16.msra.mxu0 0
    %611 = vmatprep.subr.bf16.mxu0 0
    %612 = vmatpush1.bf16.msra.mxu0 0
    %613 = vmatprep.subr.bf16.mxu0 0
    %614 = vmatpush1.bf16.msra.mxu0 0
    %615 = vmatprep.subr.bf16.mxu0 0
    %616 = vmatpush1.bf16.msra.mxu0 0
    %617 = vmatprep.subr.bf16.mxu0 0
    %618 = vmatpush1.bf16.msra.mxu0 0
    %619 = vmatprep.subr.bf16.mxu0 0
    %620 = vmatpush1.bf16.msra.mxu0 0
    %621 = vmatprep.subr.bf16.mxu0 0
    %622 = vmatpush1.bf16.msra.mxu0 0
    %623 = vmatprep.subr.bf16.mxu0 0
    %624 = vmatpush1.bf16.msra.mxu0 0
    %625 = vmatprep.subr.bf16.mxu0 0
    %626 = vmatpush1.bf16.msra.mxu0 0
    %627 = vmatprep.subr.bf16.mxu0 0
    %628 = vmatpush1.bf16.msra.mxu0 0
    %629 = vmatprep.subr.bf16.mxu0 0
    %630 = vmatpush1.bf16.msra.mxu0 0
    %631 = vmatprep.subr.bf16.mxu0 0
    %632 = vmatpush1.bf16.msra.mxu0 0
    %633 = vmatprep.subr.bf16.mxu0 0
    %634 = vmatpush1.bf16.msra.mxu0 0
    %635 = vmatprep.subr.bf16.mxu0 0
    %636 = vmatpush1.bf16.msra.mxu0 0
    %637 = vmatprep.mubr.bf16.mxu0 0
    %638 = vmatmul.mubr.bf16.gmra.mrb[0].mxu0 %v603
    %v639 = vpop.f32.mrb[0].mxu0
    %v640 = vadd.f32 %v570, %v639
    %v641 = vpop.f32.mrb[0].mxu0
    %v642 = vadd.f32 %v574, %v641
    %v643 = vpop.f32.mrb[0].mxu0
    %v644 = vadd.f32 %v570, %v643
    %v645 = vpop.f32.mrb[0].mxu0
    %v646 = vadd.f32 %v574, %v645
    %647 = vdwg.mxu0
    %648 = vst [vmem:[#allocation8 + $0x10] sm:$0xff] %v640
    %649 = vst [vmem:[#allocation8 + $0x58] sm:$0xff] %v644
    %652 = vrot.lane.b32.xlu0 %v642, 1
    %v653 = vpop.permute.xlu0 %652
    %654 = vrot.lane.b32.xlu0 %v646, 1
    %v655 = vpop.permute.xlu0 %654
    %658 = vst.msk [vmem:[#allocation8 + $0x30] sm:$0xff] %vm551, %v653
    %659 = vst.msk [vmem:[#allocation8 + $0x38] sm:$0xff] %vm447, %v653
    %660 = vst.msk [vmem:[#allocation8 + $0x78] sm:$0xff] %vm551, %v655
    %661 = vst.msk [vmem:[#allocation8 + $0x80] sm:$0xff] %vm447, %v655
    %s662 = scalar_lea.vmem [#allocation2], 48
    %v663 = vld [vmem:[%s662] sm:$0xf]
    %v664 = vld [vmem:[%s662 + $0x4] sm:$0xf]
    %s665 = scalar_lea.vmem [#allocation7], 64
    %v666 = vld [vmem:[%s665] sm:$0xff]
    %v667 = vld [vmem:[%s665 + $0x8] sm:$0xff]
    %v668 = vld [vmem:[%s665 + $0x10] sm:$0xff]
    %v669 = vld [vmem:[%s665 + $0x18] sm:$0xff]
    %s670 = scalar_lea.vmem %s4, 4
    %v671 = vld [vmem:[%s670] sm:$0x3]
    %v673 = vlaneseq
    %v674 = vshrl.u32 %v673, 7
    %v675 = vsub.s32 0, %v674
    %v676 = vrot.slane %v671, %v675
    %v677 = vlaneseq
    %v678 = vshrl.u32 %v677, 7
    %v679 = vsub.s32 1, %v678
    %v680 = vrot.slane %v671, %v679
    %v685 = vunpack.c.l.b16 %v663
    %v686 = vunpack.c.l.b16 %v664
    %v687 = vpack.c.b16 %v686, %v685
    %v692 = vunpack.c.l.b16 %v666
    %v693 = vunpack.c.h.b16 %v666
    %v694 = vunpack.c.l.b16 %v667
    %v695 = vunpack.c.h.b16 %v667
    %v696 = vunpack.c.l.b16 %v668
    %v697 = vunpack.c.h.b16 %v668
    %v698 = vunpack.c.l.b16 %v669
    %v699 = vunpack.c.h.b16 %v669
    %v700 = vpack.c.b16 %v694, %v692
    %v701 = vpack.c.b16 %v695, %v693
    %v702 = vpack.c.b16 %v698, %v696
    %v703 = vpack.c.b16 %v699, %v697
    %v709 = vsel %vm99, %v687, 0
    %711 = vmatprep.subr.bf16.mxu0 %v701
    %712 = vmatpush1.bf16.msra.mxu0 %v700
    %713 = vmatprep.subr.bf16.mxu0 %v703
    %714 = vmatpush1.bf16.msra.mxu0 %v702
    %715 = vmatprep.subr.bf16.mxu0 0
    %716 = vmatpush1.bf16.msra.mxu0 0
    %717 = vmatprep.subr.bf16.mxu0 0
    %718 = vmatpush1.bf16.msra.mxu0 0
    %719 = vmatprep.subr.bf16.mxu0 0
    %720 = vmatpush1.bf16.msra.mxu0 0
    %721 = vmatprep.subr.bf16.mxu0 0
    %722 = vmatpush1.bf16.msra.mxu0 0
    %723 = vmatprep.subr.bf16.mxu0 0
    %724 = vmatpush1.bf16.msra.mxu0 0
    %725 = vmatprep.subr.bf16.mxu0 0
    %726 = vmatpush1.bf16.msra.mxu0 0
    %727 = vmatprep.subr.bf16.mxu0 0
    %728 = vmatpush1.bf16.msra.mxu0 0
    %729 = vmatprep.subr.bf16.mxu0 0
    %730 = vmatpush1.bf16.msra.mxu0 0
    %731 = vmatprep.subr.bf16.mxu0 0
    %732 = vmatpush1.bf16.msra.mxu0 0
    %733 = vmatprep.subr.bf16.mxu0 0
    %734 = vmatpush1.bf16.msra.mxu0 0
    %735 = vmatprep.subr.bf16.mxu0 0
    %736 = vmatpush1.bf16.msra.mxu0 0
    %737 = vmatprep.subr.bf16.mxu0 0
    %738 = vmatpush1.bf16.msra.mxu0 0
    %739 = vmatprep.subr.bf16.mxu0 0
    %740 = vmatpush1.bf16.msra.mxu0 0
    %741 = vmatprep.subr.bf16.mxu0 0
    %742 = vmatpush1.bf16.msra.mxu0 0
    %743 = vmatprep.mubr.bf16.mxu0 0
    %744 = vmatmul.mubr.bf16.gmra.mrb[0].mxu0 %v709
    %v745 = vpop.f32.mrb[0].mxu0
    %v746 = vadd.f32 %v676, %v745
    %v747 = vpop.f32.mrb[0].mxu0
    %v748 = vadd.f32 %v680, %v747
    %v749 = vpop.f32.mrb[0].mxu0
    %v750 = vadd.f32 %v676, %v749
    %v751 = vpop.f32.mrb[0].mxu0
    %v752 = vadd.f32 %v680, %v751
    %753 = vdwg.mxu0
    %754 = vst [vmem:[#allocation8 + $0x18] sm:$0xff] %v746
    %755 = vst [vmem:[#allocation8 + $0x60] sm:$0xff] %v750
    %758 = vrot.lane.b32.xlu0 %v748, 1
    %v759 = vpop.permute.xlu0 %758
    %760 = vrot.lane.b32.xlu0 %v752, 1
    %v761 = vpop.permute.xlu0 %760
    %764 = vst.msk [vmem:[#allocation8 + $0x38] sm:$0xff] %vm551, %v759
    %765 = vst.msk [vmem:[#allocation8 + $0x40] sm:$0xff] %vm447, %v759
    %766 = vst.msk [vmem:[#allocation8 + $0x80] sm:$0xff] %vm551, %v761
    %767 = vst.msk [vmem:[#allocation8 + $0x88] sm:$0xff] %vm447, %v761
    %s768 = scalar_lea.vmem [#allocation2], 56
    %v769 = vld [vmem:[%s768] sm:$0xf]
    %v770 = vld [vmem:[%s768 + $0x4] sm:$0xf]
    %v771 = vld [vmem:[%s5] sm:$0xf]
    %v772 = vld [vmem:[%s5 + $0x4] sm:$0xf]
    %v773 = vld [vmem:[%s5 + $0x8] sm:$0xf]
    %v774 = vld [vmem:[%s5 + $0xc] sm:$0xf]
    %v775 = vld [vmem:[%s6] sm:$0x1]
    %v777 = vlaneseq
    %v778 = vshrl.u32 %v777, 7
    %v779 = vsub.s32 0, %v778
    %v780 = vrot.slane %v775, %v779
    %v784 = vunpack.c.l.b16 %v769
    %v785 = vunpack.c.l.b16 %v770
    %v786 = vpack.c.b16 %v785, %v784
    %v791 = vunpack.c.l.b16 %v771
    %v792 = vunpack.c.l.b16 %v772
    %v793 = vunpack.c.l.b16 %v773
    %v794 = vunpack.c.l.b16 %v774
    %v795 = vpack.c.b16 %v792, %v791
    %v796 = vpack.c.b16 %v794, %v793
    %v800 = vsel %vm99, %v786, 0
    %802 = vmatprep.subr.bf16.mxu0 0
    %803 = vmatpush1.bf16.msra.mxu0 %v795
    %804 = vmatprep.subr.bf16.mxu0 0
    %805 = vmatpush1.bf16.msra.mxu0 %v796
    %806 = vmatprep.subr.bf16.mxu0 0
    %807 = vmatpush1.bf16.msra.mxu0 0
    %808 = vmatprep.subr.bf16.mxu0 0
    %809 = vmatpush1.bf16.msra.mxu0 0
    %810 = vmatprep.subr.bf16.mxu0 0
    %811 = vmatpush1.bf16.msra.mxu0 0
    %812 = vmatprep.subr.bf16.mxu0 0
    %813 = vmatpush1.bf16.msra.mxu0 0
    %814 = vmatprep.subr.bf16.mxu0 0
    %815 = vmatpush1.bf16.msra.mxu0 0
    %816 = vmatprep.subr.bf16.mxu0 0
    %817 = vmatpush1.bf16.msra.mxu0 0
    %818 = vmatprep.subr.bf16.mxu0 0
    %819 = vmatpush1.bf16.msra.mxu0 0
    %820 = vmatprep.subr.bf16.mxu0 0
    %821 = vmatpush1.bf16.msra.mxu0 0
    %822 = vmatprep.subr.bf16.mxu0 0
    %823 = vmatpush1.bf16.msra.mxu0 0
    %824 = vmatprep.subr.bf16.mxu0 0
    %825 = vmatpush1.bf16.msra.mxu0 0
    %826 = vmatprep.subr.bf16.mxu0 0
    %827 = vmatpush1.bf16.msra.mxu0 0
    %828 = vmatprep.subr.bf16.mxu0 0
    %829 = vmatpush1.bf16.msra.mxu0 0
    %830 = vmatprep.subr.bf16.mxu0 0
    %831 = vmatpush1.bf16.msra.mxu0 0
    %832 = vmatprep.subr.bf16.mxu0 0
    %833 = vmatpush1.bf16.msra.mxu0 0
    %834 = vmatprep.mubr.bf16.mxu0 0
    %835 = vmatmul.mubr.bf16.gmra.mrb[0].mxu0 %v800
    %v836 = vpop.f32.mrb[0].mxu0
    %v837 = vadd.f32 %v780, %v836
    %v838 = vpop.f32.mrb[0].mxu0
    %v839 = vpop.f32.mrb[0].mxu0
    %v840 = vadd.f32 %v780, %v839
    %v841 = vpop.f32.mrb[0].mxu0
    %842 = vdwg.mxu0
    %843 = vst.msk [vmem:[#allocation8 + $0x20] sm:$0xff] %vm447, %v837
    %844 = vst.msk [vmem:[#allocation8 + $0x68] sm:$0xff] %vm447, %v840
    %vm845 = vcmask 15368
    %846 = vst.msk [vmem:[#allocation8 + $0x40] sm:$0xff] %vm845, %v837
    %847 = vst.msk [vmem:[#allocation8 + $0x88] sm:$0xff] %vm845, %v840
    // Predicated region
    $region42: #{tpu_custom_call.1} parent=1 // pred_check
      _
    $region43: #{tpu_custom_call.1} parent=1 // pred_check_branch
      %849 = sbr.rel (0) target = $region45
    $region44: #{tpu_custom_call.1} parent=1 // pred_region
      %s851 = ssub.s32 2304, 2304
      %852 = vsyncadd [#allocation4], %s851
      %s853 = sshll.u32 [#allocation8], 4
      %s854 = int_to_ptr.vmem [resolvable:$true] %s853
      %859 = dma.vmem_to_hbm [thread:$0]  %s854, 2304, %s7, [#allocation4], 1152, 1152, 72
    $region45: #{tpu_custom_call.1} parent=1 // pred_fallthru
      _
    // Predicated region
    $region46: #{tpu_custom_call.1} parent=1 // pred_check
      _
    $region47: #{tpu_custom_call.1} parent=1 // pred_check_branch
      %861 = sbr.rel (0) target = $region49
    $region48: #{tpu_custom_call.1} parent=1 // pred_region
      %862 = dma.done [#allocation4], 2304
    $region49: #{tpu_custom_call.1} parent=1 // pred_fallthru
      _
    %863 = vsyncpa [#allocation3], 1
    %864 = vsyncpa [#allocation6], 1
    %865 = vsyncpa [#allocation4], 1

</llo_original>
